<compile_context>
chip_gen: v5e
topology: v5e:2x2
jax: 0.10.0
libtpu: 0.0.40
codegen_flags: <defaults>
</compile_context>

<pallas_src>
import functools

import jax
import jax.numpy as jnp
from jax.experimental import pallas as pl
from jax.experimental.pallas import tpu as pltpu


def _cdiv(a, b):
    return -(-a // b)


def _round_up(x, m):
    return _cdiv(x, m) * m


def _num_tensorcores():
    """Best-effort TensorCores per chip: 2 on v7x, 1 on v5e/v6e (safe fallback: 1)."""
    try:
        dev = jax.devices()[0]
        if dev.platform != "tpu":
            return 1
        kind = str(getattr(dev, "device_kind", "")).lower()
        if "v7" in kind or "7x" in kind:
            return 2
    except Exception:
        pass
    return 1


def _mpjpe_kernel(pred_ref, true_ref, sel_ref, out_ref, *, tm, n_rows, tiles_per_core):
    # pred_ref / true_ref: (tm, J*C) row tiles in the natural (B*T, J*C) layout.
    # sel_ref:             (J*C, J) 0/1 selection matrix (resident, tiny).
    # out_ref:             (8, LW) per-core partial-sum block, resident across the
    #                      "arbitrary" tile axis (its index_map ignores `i`).
    g = pl.program_id(0)
    i = pl.program_id(1)

    @pl.when(i == 0)
    def _init():
        out_ref[...] = jnp.zeros_like(out_ref)

    d = pred_ref[...].astype(jnp.float32) - true_ref[...].astype(jnp.float32)
    d2 = d * d                                                          # (tm, J*C)  VPU
    # Fold the C coordinates of each joint: (tm, J*C) @ (J*C, J) -> (tm, J).  MXU.
    sq = jnp.dot(d2, sel_ref[...], preferred_element_type=jnp.float32)
    norms = jnp.sqrt(sq)                                                # (tm, J)    EUP

    # Mask rows beyond the true row count (ragged tail / clamped trailing steps).
    row0 = (g * tiles_per_core + i) * tm                                # logical row origin
    rows = row0 + jax.lax.broadcasted_iota(jnp.int32, (tm, 1), 0)
    norms = jnp.where(rows < n_rows, norms, 0.0)

    nj = norms.shape[1]
    # Per-lane (per-joint-column) partial sums: sublane reduce only, no per-step
    # cross-lane scalar reduce; the single cross-lane reduce happens in the wrapper.
    colsum = jnp.sum(norms, axis=0, keepdims=True)                      # (1, J)
    out_ref[0:1, 0:nj] = out_ref[0:1, 0:nj] + colsum


def mpjpe_loss(y_pred_pose, y_true_future_pose, nJ):
    """Pallas equivalent of MPJPE.forward: returns {'loss': mean per-joint L2 error}."""
    B, T, JC = y_pred_pose.shape
    assert JC % nJ == 0, "Number of joints * dim of each joint is not dividable by nJ"
    J = nJ
    C = JC // J
    M = B * T                         # rows: one row = all joints of one (batch, time)
    N = M * J                         # total joint count

    # Free reshapes only (leading-dim merge): no pad, no transpose, no diff copy.
    pred2d = y_pred_pose.reshape(M, JC)
    true2d = y_true_future_pose.reshape(M, JC)

    # 0/1 selection matrix that sums the C coordinates of each joint.
    # TODO(synk): for very large J (e.g. dense meshes) replace this (JC, J) matrix
    # with a shifted-add (pltpu.roll) lane reduction to bound its VMEM footprint.
    sel = (jnp.arange(JC, dtype=jnp.int32)[:, None] // C
           == jnp.arange(J, dtype=jnp.int32)[None, :]).astype(jnp.float32)

    # ---- Tiling: budget rows from the actual input dtype (~8 MiB / input / buffer).
    itemsize = max(jnp.dtype(y_pred_pose.dtype).itemsize,
                   jnp.dtype(y_true_future_pose.dtype).itemsize)
    lane_width = _round_up(JC, 128)            # VMEM lane padding of one block row
    budget_bytes = 8 * 1024 * 1024
    tm = (budget_bytes // (lane_width * itemsize)) // 8 * 8
    tm = max(8, min(tm, _round_up(M, 8)))
    nblocks = _cdiv(M, tm)

    G = _num_tensorcores() if nblocks >= 2 else 1   # 2 only on dual-core (v7x)
    tiles_per_core = _cdiv(nblocks, G)
    needs_clamp = G * tiles_per_core > nblocks

    LW = _round_up(max(J, 1), 128)             # accumulator lane width (>=128)

    def in_map(g, i):
        idx = g * tiles_per_core + i
        if needs_clamp:
            # Trailing empty steps re-read the last valid block (rows are masked
            # in-kernel by the logical index), keeping every DMA in bounds.
            idx = jnp.minimum(idx, nblocks - 1)
        return (idx, 0)

    kernel = functools.partial(_mpjpe_kernel, tm=tm, n_rows=M,
                               tiles_per_core=tiles_per_core)

    partials = pl.pallas_call(
        kernel,
        out_shape=jax.ShapeDtypeStruct((G * 8, LW), jnp.float32),
        grid=(G, tiles_per_core),
        in_specs=[
            pl.BlockSpec((tm, JC), in_map),
            pl.BlockSpec((tm, JC), in_map),
            pl.BlockSpec((JC, J), lambda g, i: (0, 0)),   # resident tiny constant
        ],
        out_specs=pl.BlockSpec((8, LW), lambda g, i: (g, 0)),
        compiler_params=pltpu.CompilerParams(
            dimension_semantics=("parallel", "arbitrary"),
            vmem_limit_bytes=48 * 1024 * 1024,
        ),
    )(pred2d, true2d, sel)

    loss = jnp.sum(partials) / jnp.float32(N)
    return {"loss": loss}


if __name__ == "__main__":
    # Small shapes consistent with the module: B=2, T=8, nJ=4 joints, C=3 dims/joint.
    B, T, nJ, C = 2, 8, 4, 3
    key = jax.random.PRNGKey(0)
    k1, k2 = jax.random.split(key)
    y_pred = {"pred_pose": jax.random.normal(k1, (B, T, nJ * C), dtype=jnp.float32)}
    y_true = {"future_pose": jax.random.normal(k2, (B, T, nJ * C), dtype=jnp.float32)}

    result = mpjpe_loss(y_pred["pred_pose"], y_true["future_pose"], nJ)
    loss = jax.block_until_ready(result["loss"])

    # Plain-JAX reference (mirrors the PyTorch forward).
    d = (y_pred["pred_pose"] - y_true["future_pose"]).reshape(B, T, nJ, C)
    ref = jnp.mean(jnp.linalg.norm(d, axis=-1))
    assert jnp.allclose(loss, ref, rtol=1e-5, atol=1e-6), (loss, ref)

    print("KERNEL_OK")
</pallas_src>

<mosaic_0001>
module attributes {stable_mosaic.version = 11 : i64} {
  func.func @_mpjpe_kernel(%arg0: i32, %arg1: i32, %arg2: memref<16x12xf32, #tpu.memory_space<vmem>>, %arg3: memref<16x12xf32, #tpu.memory_space<vmem>>, %arg4: memref<12x4xf32, #tpu.memory_space<vmem>>, %arg5: memref<8x128xf32, #tpu.memory_space<vmem>>) attributes {dimension_semantics = [#tpu.dimension_semantics<parallel>, #tpu.dimension_semantics<arbitrary>], iteration_bounds = array<i64: 1, 1>, scalar_prefetch = 0 : i64, scratch_operands = 0 : i64, tpu.core_type = #tpu.core_type<tc>, window_params = [{transform_indices = @transform_0, window_bounds = array<i64: 16, 12>}, {transform_indices = @transform_1, window_bounds = array<i64: 16, 12>}, {pipeline_mode = #tpu.pipeline_mode<synchronous>, transform_indices = @transform_2, window_bounds = array<i64: 12, 4>}, {transform_indices = @transform_3, window_bounds = array<i64: 8, 128>}]} {
    %c0_i32 = arith.constant 0 : i32
    %0 = arith.cmpi eq, %arg1, %c0_i32 : i32
    %1 = arith.extui %0 : i1 to i32
    %c0_i32_0 = arith.constant 0 : i32
    %2 = arith.cmpi ne, %1, %c0_i32_0 : i32
    scf.if %2 {
      %cst_13 = arith.constant 0.000000e+00 : f32
      %27 = vector.broadcast %cst_13 : f32 to vector<8x128xf32>
      %c0_14 = arith.constant 0 : index
      %c0_15 = arith.constant 0 : index
      %28 = vector.load %arg5[%c0_14, %c0_15] : memref<8x128xf32, #tpu.memory_space<vmem>>, vector<8x128xf32>
      tpu.vector_store %arg5[%c0_14, %c0_15], %27 {strides = array<i32>} : memref<8x128xf32, #tpu.memory_space<vmem>>, vector<8x128xf32>,
    } else {
    }
    %c0 = arith.constant 0 : index
    %c0_1 = arith.constant 0 : index
    %3 = vector.load %arg2[%c0, %c0_1] : memref<16x12xf32, #tpu.memory_space<vmem>>, vector<16x12xf32>
    %c0_2 = arith.constant 0 : index
    %c0_3 = arith.constant 0 : index
    %4 = vector.load %arg3[%c0_2, %c0_3] : memref<16x12xf32, #tpu.memory_space<vmem>>, vector<16x12xf32>
    %5 = arith.subf %3, %4 : vector<16x12xf32>
    %6 = arith.mulf %5, %5 : vector<16x12xf32>
    %c0_4 = arith.constant 0 : index
    %c0_5 = arith.constant 0 : index
    %7 = vector.load %arg4[%c0_4, %c0_5] : memref<12x4xf32, #tpu.memory_space<vmem>>, vector<12x4xf32>
    %cst = arith.constant dense<0.000000e+00> : vector<16x4xf32>
    %8 = tpu.matmul %6, %7, %cst {dimension_numbers = #tpu.dot_dimension_numbers<[1], [0], [0], [1], [0, 0, 1, 1], [], []>} : vector<16x12xf32>, vector<12x4xf32>, vector<16x4xf32> -> vector<16x4xf32>
    %9 = math.sqrt %8 : vector<16x4xf32>
    %c1_i32 = arith.constant 1 : i32
    %10 = arith.muli %arg0, %c1_i32 : i32
    %11 = arith.addi %10, %arg1 : i32
    %c16_i32 = arith.constant 16 : i32
    %12 = arith.muli %11, %c16_i32 : i32
    %13 = tpu.iota {dimensions = array<i32: 0>} : vector<16x1xi32>
    %14 = vector.broadcast %12 : i32 to vector<16x1xi32>
    %15 = arith.addi %14, %13 : vector<16x1xi32>
    %c16_i32_6 = arith.constant 16 : i32
    %16 = vector.broadcast %c16_i32_6 : i32 to vector<16x1xi32>
    %17 = arith.cmpi slt, %15, %16 : vector<16x1xi32>
    %cst_7 = arith.constant 0.000000e+00 : f32
    %18 = vector.shape_cast %17 : vector<16x1xi1> to vector<16x1xi1>
    %19 = vector.broadcast %18 : vector<16x1xi1> to vector<16x4xi1>
    %20 = vector.broadcast %cst_7 : f32 to vector<16x4xf32>
    %21 = arith.select %19, %9, %20 : vector<16x4xi1>, vector<16x4xf32>
    %cst_8 = arith.constant dense<0.000000e+00> : vector<4xf32>
    %22 = vector.multi_reduction <add>, %21, %cst_8 [0] : vector<16x4xf32> to vector<4xf32>
    %23 = vector.shape_cast %22 : vector<4xf32> to vector<1x4xf32>
    %c0_9 = arith.constant 0 : index
    %c0_10 = arith.constant 0 : index
    %24 = vector.load %arg5[%c0_9, %c0_10] : memref<8x128xf32, #tpu.memory_space<vmem>>, vector<1x4xf32>
    %25 = arith.addf %24, %23 : vector<1x4xf32>
    %c0_11 = arith.constant 0 : index
    %c0_12 = arith.constant 0 : index
    %26 = vector.load %arg5[%c0_11, %c0_12] : memref<8x128xf32, #tpu.memory_space<vmem>>, vector<1x4xf32>
    tpu.vector_store %arg5[%c0_11, %c0_12], %25 {strides = array<i32>} : memref<8x128xf32, #tpu.memory_space<vmem>>, vector<1x4xf32>,
    return
  }
  func.func @transform_0(%arg0: i32, %arg1: i32) -> (i32, i32) {
    %c1_i32 = arith.constant 1 : i32
    %0 = arith.muli %arg0, %c1_i32 : i32
    %1 = arith.addi %0, %arg1 : i32
    %c0_i32 = arith.constant 0 : i32
    %c0_i32_0 = arith.constant 0 : i32
    return %1, %c0_i32 : i32, i32
  }
  func.func @transform_1(%arg0: i32, %arg1: i32) -> (i32, i32) {
    %c1_i32 = arith.constant 1 : i32
    %0 = arith.muli %arg0, %c1_i32 : i32
    %1 = arith.addi %0, %arg1 : i32
    %c0_i32 = arith.constant 0 : i32
    %c0_i32_0 = arith.constant 0 : i32
    return %1, %c0_i32 : i32, i32
  }
  func.func @transform_2(%arg0: i32, %arg1: i32) -> (i32, i32) {
    %c0_i32 = arith.constant 0 : i32
    %c0_i32_0 = arith.constant 0 : i32
    %c0_i32_1 = arith.constant 0 : i32
    return %c0_i32, %c0_i32_0 : i32, i32
  }
  func.func @transform_3(%arg0: i32, %arg1: i32) -> (i32, i32) {
    %c0_i32 = arith.constant 0 : i32
    %c0_i32_0 = arith.constant 0 : i32
    return %arg0, %c0_i32 : i32, i32
  }
}

</mosaic_0001>

<llo_original>
// kernel: tpu_custom_call.1
$region0: #{tpu_custom_call.1}
  #allocation0 [shape = 'u32[]', space=smem, size = 0x4, offset = 0x4, fixed_abs, tag = 'smem constant byte address 0x4 - core index']
  #allocation1 [shape = 'u32[72,128]{1,0:T(1,128)}', space=vmem, size = 0x9000, scoped, tag = 'internal scratch']
  %s0 = inlined_call_operand.vmem [shape: f32[16,12], index: 0, kind: input, shape index: {}]
  %s1 = inlined_call_operand.hbm [shape: f32[16,12], index: 1, kind: input, shape index: {}]
  %s2 = inlined_call_operand.vmem [shape: f32[12,4], index: 2, kind: input, shape index: {}]
  %s3 = inlined_call_operand.hbm [shape: f32[8,128], index: 3, kind: output, shape index: {}]
  %s4 = sld [smem:[#allocation0]]
  $region30: #{tpu_custom_call.1} parent=0
    _
  %s6 = ssub.s32 1, %s4
  %s7 = scalar_select 0, %s6, %s4
  $region1: #{tpu_custom_call.1} parent=0
    #allocation2 [shape = 'u8[8192]{0}', space=vmem, size = 0x2000, scoped, tag = 'input window, operand 1, single buffered']
    #allocation3 [shape = 's32[1]{0}', space=sflag, size = 0x4, scoped, tag = 'scoped memory for tpu_custom_call.1']
    #allocation4 [shape = 's32[1]{0}', space=sflag, size = 0x4, scoped, tag = 'scoped memory for tpu_custom_call.1']
    #allocation5 [shape = 'u8[4096]{0}', space=vmem, size = 0x1000, scoped, tag = 'output window, operand 0, single buffered']
    %8 = vsyncpa [#allocation3], 0
    %9 = vsyncpa [#allocation4], 0
    // Predicated region
    $region2: #{tpu_custom_call.1} parent=1 // pred_check
      _
    $region3: #{tpu_custom_call.1} parent=1 // pred_check_branch
      %11 = sbr.rel (0) target = $region5
    $region4: #{tpu_custom_call.1} parent=1 // pred_region
      %s12 = sadd.s32 0, 0
      %s13 = smul.u32 2, %s12
      %p14 = scmp.lt.s32.totalorder %s13, 1
      %s15 = scalar_select %p14, %s13, 1
      %s16 = smul.addr %s15, 8
      %s17 = scalar_lea.vmem %s0, %s16
      %s18 = sadd.s32 0, 0
      %s19 = smul.u32 2, %s18
    $region5: #{tpu_custom_call.1} parent=1 // pred_fallthru
      _
    // Predicated region
    $region6: #{tpu_custom_call.1} parent=1 // pred_check
      _
    $region7: #{tpu_custom_call.1} parent=1 // pred_check_branch
      %21 = sbr.rel (0) target = $region9
    $region8: #{tpu_custom_call.1} parent=1 // pred_region
      %s22 = sadd.s32 0, 0
      %s23 = smul.u32 2, %s22
      %25 = vsyncadd [#allocation3], 0
      %s26 = smul.addr %s23, 8
      %s27 = scalar_lea.hbm %s1, %s26
      %s28 = sshll.u32 %s27, 4
      %s29 = int_to_ptr.hbm [resolvable:$true] %s28
      %s30 = sshll.u32 [#allocation2], 4
      %s31 = int_to_ptr.vmem [resolvable:$true] %s30
      %36 = dma.hbm_to_vmem [thread:$0]  %s29, 256, %s31, [#allocation3], 128, 128, 8
    $region9: #{tpu_custom_call.1} parent=1 // pred_fallthru
      _
    // Predicated region
    $region10: #{tpu_custom_call.1} parent=1 // pred_check
      _
    $region11: #{tpu_custom_call.1} parent=1 // pred_check_branch
      %38 = sbr.rel (0) target = $region13
    $region12: #{tpu_custom_call.1} parent=1 // pred_region
      _
    $region13: #{tpu_custom_call.1} parent=1 // pred_fallthru
      _
    // Predicated region
    $region14: #{tpu_custom_call.1} parent=1 // pred_check
      _
    $region15: #{tpu_custom_call.1} parent=1 // pred_check_branch
      %40 = sbr.rel (0) target = $region17
    $region16: #{tpu_custom_call.1} parent=1 // pred_region
      %42 = dma.done [#allocation3], 256
    $region17: #{tpu_custom_call.1} parent=1 // pred_fallthru
      _
    %s43 = sadd.s32 0, 0
    %s44 = smul.u32 2, %s43
    %p45 = scmp.lt.s32.totalorder %s44, 1
    %s46 = scalar_select %p45, %s44, 1
    %s47 = smul.addr %s46, 8
    %s48 = scalar_lea.vmem %s0, %s47
    %s49 = sadd.s32 0, 0
    %s50 = smul.u32 2, %s49
    %p51 = scmp.lt.s32.totalorder %s50, 1
    %s52 = scalar_select %p51, %s50, 1
    %s53 = smul.addr %s52, 8
    %s54 = scalar_lea.vmem %s0, %s53
    %s55 = sadd.s32 0, 0
    %s56 = smul.u32 2, %s55
    %s57 = sadd.s32 0, 0
    %s58 = smul.u32 2, %s57
    %p59 = scmp.eq.s32.totalorder 0, 0
    // Predicated region
    $region18: #{tpu_custom_call.1} parent=1 // pred_check
      %p60 = pneg %p59
    $region19: #{tpu_custom_call.1} parent=1 // pred_check_branch
      %62 = sbr.rel (%p60) target = $region21
    $region20: #{tpu_custom_call.1} parent=1 // pred_region
      %63 = vst [vmem:[#allocation5] sm:$0xff] 0.0
    $region21: #{tpu_custom_call.1} parent=1 // pred_fallthru
      _
    %v64 = vld [vmem:[%s54] sm:$0xff]
    %v65 = vld [vmem:[%s54 + $0x8] sm:$0xff]
    %v66 = vld [vmem:[#allocation2] sm:$0xff]
    %v67 = vld [vmem:[#allocation2 + $0x8] sm:$0xff]
    %v68 = vsub.f32 %v64, %v66
    %v69 = vsub.f32 %v65, %v67
    %v70 = vmul.f32 %v68, %v68
    %v71 = vmul.f32 %v69, %v69
    %v72 = vld [vmem:[%s2] sm:$0xff]
    %v73 = vld [vmem:[%s2 + $0x8] sm:$0xf]
    %vm74 = vcmask 97280
    %v76 = vsel %vm74, %v70, 0
    %v79 = vsel %vm74, %v71, 0
    %vm81 = vcmask 1043456
    %v83 = vsel %vm81, %v73, 0
    %85 = vmatpush.msra.mxu0 0.0
    %86 = vmatpush.msra.mxu0 0.0
    %87 = vmatpush.msra.mxu0 0.0
    %88 = vmatpush.msra.mxu0 0.0
    %89 = vmatpush.msra.mxu0 0.0
    %90 = vmatpush.msra.mxu0 0.0
    %91 = vmatpush.msra.mxu0 0.0
    %92 = vmatpush.msra.mxu0 0.0
    %93 = vmatpush.msra.mxu0 0.0
    %94 = vmatpush.msra.mxu0 0.0
    %95 = vmatpush.msra.mxu0 0.0
    %96 = vmatpush.msra.mxu0 0.0
    %97 = vmatpush.msra.mxu0 0.0
    %98 = vmatpush.msra.mxu0 0.0
    %99 = vmatpush.msra.mxu0 %v83
    %100 = vmatpush.msra.mxu0 %v72
    %101 = vmatmul.f32.gmra.mxu0 %v76
    %v102 = vpop.f32.mrf.mxu0
    %v103 = vadd.f32 0.0, %v102
    %104 = vmatmul.f32.gmra.mxu0 %v79
    %v105 = vpop.f32.mrf.mxu0
    %v106 = vadd.f32 0.0, %v105
    %107 = vdwg.mxu0
    %v108 = vrsqrt.pop %v103
    %v109 = vmul.f32 %v108, %v103
    %v110 = vmul.f32 %v109, %v108
    %v111 = vmul.f32 0.5, %v110
    %v112 = vsub.f32 1.5, %v111
    %v113 = vmul.f32 %v108, %v112
    %v114 = vmul.f32 %v103, %v113
    %vm115 = vcmp.eq.f32.partialorder %v103, inf
    %v116 = vsel %vm115, %v103, %v114
    %vm117 = vcmp.eq.f32.partialorder %v103, 0.0
    %v118 = vand.u32 %v103, 2147483648
    %v119 = vsel %vm117, %v118, %v116
    %v120 = vrsqrt.pop %v106
    %v121 = vmul.f32 %v120, %v106
    %v122 = vmul.f32 %v121, %v120
    %v123 = vmul.f32 0.5, %v122
    %v124 = vsub.f32 1.5, %v123
    %v125 = vmul.f32 %v120, %v124
    %v126 = vmul.f32 %v106, %v125
    %vm127 = vcmp.eq.f32.partialorder %v106, inf
    %v128 = vsel %vm127, %v106, %v126
    %vm129 = vcmp.eq.f32.partialorder %v106, 0.0
    %v130 = vand.u32 %v106, 2147483648
    %v131 = vsel %vm129, %v130, %v128
    %s132 = sadd.s32 0, 0
    %s133 = smul.u32 %s132, 16
    %v134 = vlaneseq
    %v135 = vshrl.u32 %v134, 7
    %v136 = vadd.s32 %v135, 8
    %v137 = vstv %s133
    %v138 = vadd.s32 %v137, %v135
    %v139 = vadd.s32 %v137, %v136
    %vm140 = vcmp.lt.s32.totalorder %v138, 16
    %vm141 = vcmp.lt.s32.totalorder %v139, 16
    %v142 = vsel %vm140, 1, 0
    %v143 = vsel %vm141, 1, 0
    %vm144 = vcmp.eq.s32.totalorder %v142, 1
    %vm145 = vcmp.eq.s32.totalorder %v143, 1
    %v146 = vsel %vm144, %v119, 0.0
    %v147 = vsel %vm145, %v131, 0.0
    %vm148 = vcmask 31744
    %v149 = vsel %vm148, %v146, 0.0
    %v150 = vsel %vm148, %v147, 0.0
    %v151 = vadd.f32 %v149, %v150
    %v152 = vrot.slane %v151, 4
    %v153 = vadd.f32 %v151, %v152
    %v154 = vrot.slane %v153, 2
    %v155 = vadd.f32 %v153, %v154
    %v156 = vrot.slane %v155, 1
    %v157 = vadd.f32 %v155, %v156
    %v158 = vld [vmem:[#allocation5] sm:$0x1]
    %v159 = vadd.f32 %v158, %v157
    %vm160 = vcmask 24576
    %161 = vst.msk [vmem:[#allocation5] sm:$0x1] %vm160, %v159
    // Predicated region
    $region22: #{tpu_custom_call.1} parent=1 // pred_check
      _
    $region23: #{tpu_custom_call.1} parent=1 // pred_check_branch
      %163 = sbr.rel (0) target = $region25
    $region24: #{tpu_custom_call.1} parent=1 // pred_region
      %165 = vsyncadd [#allocation4], 0
      %s167 = sshll.u32 [#allocation5], 4
      %s168 = int_to_ptr.vmem [resolvable:$true] %s167
      %s169 = sshll.u32 %s3, 4
      %s170 = int_to_ptr.hbm [resolvable:$true] %s169
      %172 = dma.vmem_to_hbm [thread:$0]  %s168, 128, %s170, [#allocation4]
    $region25: #{tpu_custom_call.1} parent=1 // pred_fallthru
      _
    // Predicated region
    $region26: #{tpu_custom_call.1} parent=1 // pred_check
      _
    $region27: #{tpu_custom_call.1} parent=1 // pred_check_branch
      %174 = sbr.rel (0) target = $region29
    $region28: #{tpu_custom_call.1} parent=1 // pred_region
      %176 = dma.done [#allocation4], 128
    $region29: #{tpu_custom_call.1} parent=1 // pred_fallthru
      _
    %177 = vsyncpa [#allocation3], 1
    %178 = vsyncpa [#allocation4], 1

</llo_original>
